<compile_context>
chip_gen: v7x
topology: tpu7x:2x2x1
jax: 0.10.0
libtpu: 0.0.40
codegen_flags: <defaults>
</compile_context>

<pallas_src>
import jax
import jax.numpy as jnp
from jax.experimental import pallas as pl
from jax.experimental.pallas import tpu as pltpu


def _recip(d):
    """EUP approx reciprocal + one Newton refinement (~f32-divide accuracy)."""
    r = pl.reciprocal(d, approx=True)
    return r * (2.0 - d * r)


def _solve4_batched(A, b):
    """Solve two 4x4 SPD systems in lockstep via Gaussian elimination.

    A: 4x4 nested list of (2, 1)-shaped traced values (entry [i][j] holds the
    normal-matrix entry for both curves).  b: list of 4 (2, 1) values.
    No pivoting: A = X^T X is SPD for >= 4 distinct psnr values.
    Returns [w3, w2, w1, w0], each (2, 1).
    """
    A = [list(row) for row in A]
    b = list(b)
    inv_piv = [None] * 4
    for k in range(4):
        # Pivot row k is final here; keep its reciprocal (EUP + Newton) and
        # reuse it in back-substitution: 4 reciprocals total, no divides.
        inv_piv[k] = _recip(A[k][k])
        for i in range(k + 1, 4):
            f = A[i][k] * inv_piv[k]
            for j in range(k + 1, 4):
                A[i][j] = A[i][j] - f * A[k][j]
            b[i] = b[i] - f * b[k]
    x = [None] * 4
    for i in range(3, -1, -1):
        acc = b[i]
        for j in range(i + 1, 4):
            acc = acc - A[i][j] * x[j]
        x[i] = acc * inv_piv[i]
    return x


def _polyint(w, t):
    """Antiderivative of the cubic with coefficients w=[w3,w2,w1,w0] at t."""
    t2 = t * t
    t3 = t2 * t
    t4 = t3 * t
    return (w[0] * t4 * 0.25 + w[1] * t3 * (1.0 / 3.0)
            + w[2] * t2 * 0.5 + w[3] * t)


def bdrate_kernel(br_ref, brr_ref, ps_ref, psr_ref, out_ref):
    # Per grid step: br/brr/ps/psr refs are (1, N); out_ref is (1, 1).
    n = ps_ref.shape[-1]

    # Pair the curves in VMEM: one fused (2, N) log on the EUP.
    y = jnp.log(jnp.concatenate([br_ref[...], brr_ref[...]], axis=0))  # (2, N)
    x = jnp.concatenate([ps_ref[...], psr_ref[...]], axis=0)           # (2, N)

    # Integration interval = overlap of the two psnr ranges.
    mins = jnp.min(x, axis=1, keepdims=True)          # (2, 1)
    maxs = jnp.max(x, axis=1, keepdims=True)          # (2, 1)
    min_int = jnp.maximum(mins[0:1], mins[1:2])       # (1, 1)
    max_int = jnp.minimum(maxs[0:1], maxs[1:2])       # (1, 1)

    # Mean-centred + std-scaled abscissa (f32 conditioning); exact
    # reparametrisation of the least-squares fit, undone after integration.
    inv_n = 1.0 / float(n)
    xm = jnp.sum(x, axis=1, keepdims=True) * inv_n        # (2, 1)
    xc = x - xm
    var = jnp.sum(xc * xc, axis=1, keepdims=True) * inv_n  # (2, 1)
    inv_sd = jax.lax.rsqrt(var)                             # (2, 1) EUP
    sd = var * inv_sd                                       # sqrt(var), no divide
    xs = xc * inv_sd

    x2 = xs * xs
    x3 = x2 * xs
    x4 = x2 * x2
    x5 = x3 * x2
    x6 = x3 * x3

    # All ten moment sums for both curves: one sublane-dense (20, N) slab and
    # a single cross-lane reduction (vs. the old padded (10, 2, N) stack).
    slab = jnp.concatenate(
        [xs, x2, x3, x4, x5, x6, x3 * y, x2 * y, xs * y, y], axis=0)  # (20, N)
    sums = jnp.sum(slab, axis=1, keepdims=True)                        # (20, 1)

    S1, S2, S3 = sums[0:2], sums[2:4], sums[4:6]       # each (2, 1)
    S4, S5, S6 = sums[6:8], sums[8:10], sums[10:12]
    b3, b2, b1, b0 = sums[12:14], sums[14:16], sums[16:18], sums[18:20]
    S0 = jnp.full_like(S1, float(n))

    A = [[S6, S5, S4, S3],
         [S5, S4, S3, S2],
         [S4, S3, S2, S1],
         [S3, S2, S1, S0]]
    w = _solve4_batched(A, [b3, b2, b1, b0])           # [w3, w2, w1, w0], (2, 1)

    # Definite integrals of both fitted cubics over [min_int, max_int],
    # in the scaled coordinate u = (t - mean)/sd  =>  dt = sd * du.
    u_hi = (max_int - xm) * inv_sd                     # (2, 1)
    u_lo = (min_int - xm) * inv_sd                     # (2, 1)
    ints = (_polyint(w, u_hi) - _polyint(w, u_lo)) * sd  # (2, 1): [int1, int2]

    avg_exp_diff = (ints[1:2] - ints[0:1]) * _recip(max_int - min_int)  # (1, 1)
    avg_diff = jnp.exp(avg_exp_diff) - 1.0
    out_ref[...] = avg_diff.astype(out_ref.dtype)


def bdrate_pairs(bitrates, psnrs, bitrates_ref, psnrs_ref):
    """Batched Pallas-TPU BD-rate.

    Each input: (B, N) float array (B curve pairs, N rate points each).
    Returns a (B,) float32 array of BD-rate values.
    """
    br = jnp.asarray(bitrates, jnp.float32)
    ps = jnp.asarray(psnrs, jnp.float32)
    brr = jnp.asarray(bitrates_ref, jnp.float32)
    psr = jnp.asarray(psnrs_ref, jnp.float32)
    B, N = br.shape

    # Metadata-only reshape to (B, 1, N): trailing block dims equal the
    # trailing array dims for any B/N, so the (8,128) BlockSpec rule never
    # triggers; the leading batch dim is squeezed out of the kernel refs.
    def r3(a):
        return a.reshape(B, 1, N)

    in_spec = pl.BlockSpec((None, 1, N), lambda b: (b, 0, 0))
    out = pl.pallas_call(
        bdrate_kernel,
        out_shape=jax.ShapeDtypeStruct((B, 1, 1), jnp.float32),
        grid=(B,),
        in_specs=[in_spec, in_spec, in_spec, in_spec],
        out_specs=pl.BlockSpec((None, 1, 1), lambda b: (b, 0, 0)),
        compiler_params=pltpu.CompilerParams(
            dimension_semantics=("parallel",)),
    )(r3(br), r3(brr), r3(ps), r3(psr))
    return out.reshape(B)


def bdrate(bitrate, psnr, bitrate_ref, psnr_ref):
    """Single-pair BD-rate (matches the PyTorch module's forward signature)."""
    br = jnp.asarray(bitrate, jnp.float32).reshape(1, -1)
    ps = jnp.asarray(psnr, jnp.float32).reshape(1, -1)
    brr = jnp.asarray(bitrate_ref, jnp.float32).reshape(1, -1)
    psr = jnp.asarray(psnr_ref, jnp.float32).reshape(1, -1)
    return bdrate_pairs(br, ps, brr, psr)[0]


if __name__ == "__main__":
    key = jax.random.PRNGKey(0)
    k1, k2, k3, k4 = jax.random.split(key, 4)

    N = 8   # rate points per RD curve
    B = 4   # batch of curve pairs (exercises the batched / parallel-grid path)

    base_rates = jnp.array(
        [100., 200., 400., 800., 1600., 3200., 6400., 12800.],
        dtype=jnp.float32)[None, :]
    ramp = 1.8 * jnp.arange(N, dtype=jnp.float32)[None, :]

    # Deterministic synthetic RD curves (monotone bitrate & psnr per pair).
    bitrate = base_rates * (1.0 + 0.05 * jax.random.uniform(k1, (B, N)))
    bitrate_ref = base_rates * (1.0 + 0.05 * jax.random.uniform(k2, (B, N)))
    psnr = 30.0 + ramp + 0.1 * jax.random.uniform(k3, (B, N))
    psnr_ref = 30.5 + ramp + 0.1 * jax.random.uniform(k4, (B, N))

    # Batched path: one pallas_call, grid over the B curve pairs.
    batched = bdrate_pairs(bitrate, psnr, bitrate_ref, psnr_ref)
    # Single-pair path (module-equivalent forward).
    single = bdrate(bitrate[0], psnr[0], bitrate_ref[0], psnr_ref[0])

    jax.block_until_ready((batched, single))
    print("KERNEL_OK")
</pallas_src>

<mosaic_0001>
module attributes {stable_mosaic.version = 11 : i64} {
  func.func @bdrate_kernel(%arg0: i32, %arg1: memref<1x1x8xf32, #tpu.memory_space<vmem>>, %arg2: memref<1x1x8xf32, #tpu.memory_space<vmem>>, %arg3: memref<1x1x8xf32, #tpu.memory_space<vmem>>, %arg4: memref<1x1x8xf32, #tpu.memory_space<vmem>>, %arg5: memref<1x1x1xf32, #tpu.memory_space<vmem>>) attributes {dimension_semantics = [#tpu.dimension_semantics<parallel>], iteration_bounds = array<i64: 4>, scalar_prefetch = 0 : i64, scratch_operands = 0 : i64, tpu.core_type = #tpu.core_type<tc>, window_params = [{transform_indices = @transform_0, window_bounds = array<i64: 1, 1, 8>}, {transform_indices = @transform_1, window_bounds = array<i64: 1, 1, 8>}, {transform_indices = @transform_2, window_bounds = array<i64: 1, 1, 8>}, {transform_indices = @transform_3, window_bounds = array<i64: 1, 1, 8>}, {transform_indices = @transform_4, window_bounds = array<i64: 1, 1, 1>}]} {
    %c0 = arith.constant 0 : index
    %c0_0 = arith.constant 0 : index
    %c0_1 = arith.constant 0 : index
    %0 = vector.load %arg1[%c0, %c0_0, %c0_1] : memref<1x1x8xf32, #tpu.memory_space<vmem>>, vector<1x1x8xf32>
    %1 = vector.shape_cast %0 : vector<1x1x8xf32> to vector<1x8xf32>
    %c0_2 = arith.constant 0 : index
    %c0_3 = arith.constant 0 : index
    %c0_4 = arith.constant 0 : index
    %2 = vector.load %arg2[%c0_2, %c0_3, %c0_4] : memref<1x1x8xf32, #tpu.memory_space<vmem>>, vector<1x1x8xf32>
    %3 = vector.shape_cast %2 : vector<1x1x8xf32> to vector<1x8xf32>
    %4 = tpu.concatenate %1, %3 in 0 : vector<1x8xf32>, vector<1x8xf32> -> vector<2x8xf32>
    %5 = math.log %4 : vector<2x8xf32>
    %c0_5 = arith.constant 0 : index
    %c0_6 = arith.constant 0 : index
    %c0_7 = arith.constant 0 : index
    %6 = vector.load %arg3[%c0_5, %c0_6, %c0_7] : memref<1x1x8xf32, #tpu.memory_space<vmem>>, vector<1x1x8xf32>
    %7 = vector.shape_cast %6 : vector<1x1x8xf32> to vector<1x8xf32>
    %c0_8 = arith.constant 0 : index
    %c0_9 = arith.constant 0 : index
    %c0_10 = arith.constant 0 : index
    %8 = vector.load %arg4[%c0_8, %c0_9, %c0_10] : memref<1x1x8xf32, #tpu.memory_space<vmem>>, vector<1x1x8xf32>
    %9 = vector.shape_cast %8 : vector<1x1x8xf32> to vector<1x8xf32>
    %10 = tpu.concatenate %7, %9 in 0 : vector<1x8xf32>, vector<1x8xf32> -> vector<2x8xf32>
    %cst = arith.constant dense<0x7F800000> : vector<2xf32>
    %11 = vector.multi_reduction <minimumf>, %10, %cst [1] : vector<2x8xf32> to vector<2xf32>
    %12 = vector.shape_cast %11 : vector<2xf32> to vector<2x1xf32>
    %cst_11 = arith.constant dense<0xFF800000> : vector<2xf32>
    %13 = vector.multi_reduction <maximumf>, %10, %cst_11 [1] : vector<2x8xf32> to vector<2xf32>
    %14 = vector.shape_cast %13 : vector<2xf32> to vector<2x1xf32>
    %15 = vector.extract_strided_slice %12 {offsets = [0, 0], sizes = [1, 1], strides = [1, 1]} : vector<2x1xf32> to vector<1x1xf32>
    %16 = vector.extract_strided_slice %12 {offsets = [1, 0], sizes = [1, 1], strides = [1, 1]} : vector<2x1xf32> to vector<1x1xf32>
    %17 = arith.maximumf %15, %16 : vector<1x1xf32>
    %18 = vector.extract_strided_slice %14 {offsets = [0, 0], sizes = [1, 1], strides = [1, 1]} : vector<2x1xf32> to vector<1x1xf32>
    %19 = vector.extract_strided_slice %14 {offsets = [1, 0], sizes = [1, 1], strides = [1, 1]} : vector<2x1xf32> to vector<1x1xf32>
    %20 = arith.minimumf %18, %19 : vector<1x1xf32>
    %cst_12 = arith.constant dense<0.000000e+00> : vector<2xf32>
    %21 = vector.multi_reduction <add>, %10, %cst_12 [1] : vector<2x8xf32> to vector<2xf32>
    %22 = vector.shape_cast %21 : vector<2xf32> to vector<2x1xf32>
    %cst_13 = arith.constant 1.250000e-01 : f32
    %23 = vector.broadcast %cst_13 : f32 to vector<2x1xf32>
    %24 = arith.mulf %22, %23 : vector<2x1xf32>
    %25 = vector.broadcast %24 : vector<2x1xf32> to vector<2x8xf32>
    %26 = arith.subf %10, %25 : vector<2x8xf32>
    %27 = arith.mulf %26, %26 : vector<2x8xf32>
    %cst_14 = arith.constant dense<0.000000e+00> : vector<2xf32>
    %28 = vector.multi_reduction <add>, %27, %cst_14 [1] : vector<2x8xf32> to vector<2xf32>
    %29 = vector.shape_cast %28 : vector<2xf32> to vector<2x1xf32>
    %cst_15 = arith.constant 1.250000e-01 : f32
    %30 = vector.broadcast %cst_15 : f32 to vector<2x1xf32>
    %31 = arith.mulf %29, %30 : vector<2x1xf32>
    %32 = math.rsqrt %31 : vector<2x1xf32>
    %33 = arith.mulf %31, %32 : vector<2x1xf32>
    %34 = vector.broadcast %32 : vector<2x1xf32> to vector<2x8xf32>
    %35 = arith.mulf %26, %34 : vector<2x8xf32>
    %36 = arith.mulf %35, %35 : vector<2x8xf32>
    %37 = arith.mulf %36, %35 : vector<2x8xf32>
    %38 = arith.mulf %36, %36 : vector<2x8xf32>
    %39 = arith.mulf %37, %36 : vector<2x8xf32>
    %40 = arith.mulf %37, %37 : vector<2x8xf32>
    %41 = arith.mulf %37, %5 : vector<2x8xf32>
    %42 = arith.mulf %36, %5 : vector<2x8xf32>
    %43 = arith.mulf %35, %5 : vector<2x8xf32>
    %44 = tpu.concatenate %35, %36, %37, %38, %39, %40, %41, %42, %43, %5 in 0 : vector<2x8xf32>, vector<2x8xf32>, vector<2x8xf32>, vector<2x8xf32>, vector<2x8xf32>, vector<2x8xf32>, vector<2x8xf32>, vector<2x8xf32>, vector<2x8xf32>, vector<2x8xf32> -> vector<20x8xf32>
    %cst_16 = arith.constant dense<0.000000e+00> : vector<20xf32>
    %45 = vector.multi_reduction <add>, %44, %cst_16 [1] : vector<20x8xf32> to vector<20xf32>
    %46 = vector.shape_cast %45 : vector<20xf32> to vector<20x1xf32>
    %47 = vector.extract_strided_slice %46 {offsets = [0, 0], sizes = [2, 1], strides = [1, 1]} : vector<20x1xf32> to vector<2x1xf32>
    %48 = vector.extract_strided_slice %46 {offsets = [2, 0], sizes = [2, 1], strides = [1, 1]} : vector<20x1xf32> to vector<2x1xf32>
    %49 = vector.extract_strided_slice %46 {offsets = [4, 0], sizes = [2, 1], strides = [1, 1]} : vector<20x1xf32> to vector<2x1xf32>
    %50 = vector.extract_strided_slice %46 {offsets = [6, 0], sizes = [2, 1], strides = [1, 1]} : vector<20x1xf32> to vector<2x1xf32>
    %51 = vector.extract_strided_slice %46 {offsets = [8, 0], sizes = [2, 1], strides = [1, 1]} : vector<20x1xf32> to vector<2x1xf32>
    %52 = vector.extract_strided_slice %46 {offsets = [10, 0], sizes = [2, 1], strides = [1, 1]} : vector<20x1xf32> to vector<2x1xf32>
    %53 = vector.extract_strided_slice %46 {offsets = [12, 0], sizes = [2, 1], strides = [1, 1]} : vector<20x1xf32> to vector<2x1xf32>
    %54 = vector.extract_strided_slice %46 {offsets = [14, 0], sizes = [2, 1], strides = [1, 1]} : vector<20x1xf32> to vector<2x1xf32>
    %55 = vector.extract_strided_slice %46 {offsets = [16, 0], sizes = [2, 1], strides = [1, 1]} : vector<20x1xf32> to vector<2x1xf32>
    %56 = vector.extract_strided_slice %46 {offsets = [18, 0], sizes = [2, 1], strides = [1, 1]} : vector<20x1xf32> to vector<2x1xf32>
    %cst_17 = arith.constant 8.000000e+00 : f32
    %57 = vector.broadcast %cst_17 : f32 to vector<2x1xf32>
    %58 = tpu.reciprocal %52 {approx = true} : vector<2x1xf32> -> vector<2x1xf32>
    %59 = arith.mulf %52, %58 : vector<2x1xf32>
    %cst_18 = arith.constant 2.000000e+00 : f32
    %60 = vector.broadcast %cst_18 : f32 to vector<2x1xf32>
    %61 = arith.subf %60, %59 : vector<2x1xf32>
    %62 = arith.mulf %58, %61 : vector<2x1xf32>
    %63 = arith.mulf %51, %62 : vector<2x1xf32>
    %64 = arith.mulf %63, %51 : vector<2x1xf32>
    %65 = arith.subf %50, %64 : vector<2x1xf32>
    %66 = arith.mulf %63, %50 : vector<2x1xf32>
    %67 = arith.subf %49, %66 : vector<2x1xf32>
    %68 = arith.mulf %63, %49 : vector<2x1xf32>
    %69 = arith.subf %48, %68 : vector<2x1xf32>
    %70 = arith.mulf %63, %53 : vector<2x1xf32>
    %71 = arith.subf %54, %70 : vector<2x1xf32>
    %72 = arith.mulf %50, %62 : vector<2x1xf32>
    %73 = arith.mulf %72, %51 : vector<2x1xf32>
    %74 = arith.subf %49, %73 : vector<2x1xf32>
    %75 = arith.mulf %72, %50 : vector<2x1xf32>
    %76 = arith.subf %48, %75 : vector<2x1xf32>
    %77 = arith.mulf %72, %49 : vector<2x1xf32>
    %78 = arith.subf %47, %77 : vector<2x1xf32>
    %79 = arith.mulf %72, %53 : vector<2x1xf32>
    %80 = arith.subf %55, %79 : vector<2x1xf32>
    %81 = arith.mulf %49, %62 : vector<2x1xf32>
    %82 = arith.mulf %81, %51 : vector<2x1xf32>
    %83 = arith.subf %48, %82 : vector<2x1xf32>
    %84 = arith.mulf %81, %50 : vector<2x1xf32>
    %85 = arith.subf %47, %84 : vector<2x1xf32>
    %86 = arith.mulf %81, %49 : vector<2x1xf32>
    %87 = arith.subf %57, %86 : vector<2x1xf32>
    %88 = arith.mulf %81, %53 : vector<2x1xf32>
    %89 = arith.subf %56, %88 : vector<2x1xf32>
    %90 = tpu.reciprocal %65 {approx = true} : vector<2x1xf32> -> vector<2x1xf32>
    %91 = arith.mulf %65, %90 : vector<2x1xf32>
    %cst_19 = arith.constant 2.000000e+00 : f32
    %92 = vector.broadcast %cst_19 : f32 to vector<2x1xf32>
    %93 = arith.subf %92, %91 : vector<2x1xf32>
    %94 = arith.mulf %90, %93 : vector<2x1xf32>
    %95 = arith.mulf %74, %94 : vector<2x1xf32>
    %96 = arith.mulf %95, %67 : vector<2x1xf32>
    %97 = arith.subf %76, %96 : vector<2x1xf32>
    %98 = arith.mulf %95, %69 : vector<2x1xf32>
    %99 = arith.subf %78, %98 : vector<2x1xf32>
    %100 = arith.mulf %95, %71 : vector<2x1xf32>
    %101 = arith.subf %80, %100 : vector<2x1xf32>
    %102 = arith.mulf %83, %94 : vector<2x1xf32>
    %103 = arith.mulf %102, %67 : vector<2x1xf32>
    %104 = arith.subf %85, %103 : vector<2x1xf32>
    %105 = arith.mulf %102, %69 : vector<2x1xf32>
    %106 = arith.subf %87, %105 : vector<2x1xf32>
    %107 = arith.mulf %102, %71 : vector<2x1xf32>
    %108 = arith.subf %89, %107 : vector<2x1xf32>
    %109 = tpu.reciprocal %97 {approx = true} : vector<2x1xf32> -> vector<2x1xf32>
    %110 = arith.mulf %97, %109 : vector<2x1xf32>
    %cst_20 = arith.constant 2.000000e+00 : f32
    %111 = vector.broadcast %cst_20 : f32 to vector<2x1xf32>
    %112 = arith.subf %111, %110 : vector<2x1xf32>
    %113 = arith.mulf %109, %112 : vector<2x1xf32>
    %114 = arith.mulf %104, %113 : vector<2x1xf32>
    %115 = arith.mulf %114, %99 : vector<2x1xf32>
    %116 = arith.subf %106, %115 : vector<2x1xf32>
    %117 = arith.mulf %114, %101 : vector<2x1xf32>
    %118 = arith.subf %108, %117 : vector<2x1xf32>
    %119 = tpu.reciprocal %116 {approx = true} : vector<2x1xf32> -> vector<2x1xf32>
    %120 = arith.mulf %116, %119 : vector<2x1xf32>
    %cst_21 = arith.constant 2.000000e+00 : f32
    %121 = vector.broadcast %cst_21 : f32 to vector<2x1xf32>
    %122 = arith.subf %121, %120 : vector<2x1xf32>
    %123 = arith.mulf %119, %122 : vector<2x1xf32>
    %124 = arith.mulf %118, %123 : vector<2x1xf32>
    %125 = arith.mulf %99, %124 : vector<2x1xf32>
    %126 = arith.subf %101, %125 : vector<2x1xf32>
    %127 = arith.mulf %126, %113 : vector<2x1xf32>
    %128 = arith.mulf %67, %127 : vector<2x1xf32>
    %129 = arith.subf %71, %128 : vector<2x1xf32>
    %130 = arith.mulf %69, %124 : vector<2x1xf32>
    %131 = arith.subf %129, %130 : vector<2x1xf32>
    %132 = arith.mulf %131, %94 : vector<2x1xf32>
    %133 = arith.mulf %51, %132 : vector<2x1xf32>
    %134 = arith.subf %53, %133 : vector<2x1xf32>
    %135 = arith.mulf %50, %127 : vector<2x1xf32>
    %136 = arith.subf %134, %135 : vector<2x1xf32>
    %137 = arith.mulf %49, %124 : vector<2x1xf32>
    %138 = arith.subf %136, %137 : vector<2x1xf32>
    %139 = arith.mulf %138, %62 : vector<2x1xf32>
    %140 = vector.broadcast %20 : vector<1x1xf32> to vector<2x1xf32>
    %141 = arith.subf %140, %24 : vector<2x1xf32>
    %142 = arith.mulf %141, %32 : vector<2x1xf32>
    %143 = vector.broadcast %17 : vector<1x1xf32> to vector<2x1xf32>
    %144 = arith.subf %143, %24 : vector<2x1xf32>
    %145 = arith.mulf %144, %32 : vector<2x1xf32>
    %146 = arith.mulf %142, %142 : vector<2x1xf32>
    %147 = arith.mulf %146, %142 : vector<2x1xf32>
    %148 = arith.mulf %147, %142 : vector<2x1xf32>
    %149 = arith.mulf %139, %148 : vector<2x1xf32>
    %cst_22 = arith.constant 2.500000e-01 : f32
    %150 = vector.broadcast %cst_22 : f32 to vector<2x1xf32>
    %151 = arith.mulf %149, %150 : vector<2x1xf32>
    %152 = arith.mulf %132, %147 : vector<2x1xf32>
    %cst_23 = arith.constant 0.333333343 : f32
    %153 = vector.broadcast %cst_23 : f32 to vector<2x1xf32>
    %154 = arith.mulf %152, %153 : vector<2x1xf32>
    %155 = arith.addf %151, %154 : vector<2x1xf32>
    %156 = arith.mulf %127, %146 : vector<2x1xf32>
    %cst_24 = arith.constant 5.000000e-01 : f32
    %157 = vector.broadcast %cst_24 : f32 to vector<2x1xf32>
    %158 = arith.mulf %156, %157 : vector<2x1xf32>
    %159 = arith.addf %155, %158 : vector<2x1xf32>
    %160 = arith.mulf %124, %142 : vector<2x1xf32>
    %161 = arith.addf %159, %160 : vector<2x1xf32>
    %162 = arith.mulf %145, %145 : vector<2x1xf32>
    %163 = arith.mulf %162, %145 : vector<2x1xf32>
    %164 = arith.mulf %163, %145 : vector<2x1xf32>
    %165 = arith.mulf %139, %164 : vector<2x1xf32>
    %cst_25 = arith.constant 2.500000e-01 : f32
    %166 = vector.broadcast %cst_25 : f32 to vector<2x1xf32>
    %167 = arith.mulf %165, %166 : vector<2x1xf32>
    %168 = arith.mulf %132, %163 : vector<2x1xf32>
    %cst_26 = arith.constant 0.333333343 : f32
    %169 = vector.broadcast %cst_26 : f32 to vector<2x1xf32>
    %170 = arith.mulf %168, %169 : vector<2x1xf32>
    %171 = arith.addf %167, %170 : vector<2x1xf32>
    %172 = arith.mulf %127, %162 : vector<2x1xf32>
    %cst_27 = arith.constant 5.000000e-01 : f32
    %173 = vector.broadcast %cst_27 : f32 to vector<2x1xf32>
    %174 = arith.mulf %172, %173 : vector<2x1xf32>
    %175 = arith.addf %171, %174 : vector<2x1xf32>
    %176 = arith.mulf %124, %145 : vector<2x1xf32>
    %177 = arith.addf %175, %176 : vector<2x1xf32>
    %178 = arith.subf %161, %177 : vector<2x1xf32>
    %179 = arith.mulf %178, %33 : vector<2x1xf32>
    %180 = vector.extract_strided_slice %179 {offsets = [1, 0], sizes = [1, 1], strides = [1, 1]} : vector<2x1xf32> to vector<1x1xf32>
    %181 = vector.extract_strided_slice %179 {offsets = [0, 0], sizes = [1, 1], strides = [1, 1]} : vector<2x1xf32> to vector<1x1xf32>
    %182 = arith.subf %180, %181 : vector<1x1xf32>
    %183 = arith.subf %20, %17 : vector<1x1xf32>
    %184 = tpu.reciprocal %183 {approx = true} : vector<1x1xf32> -> vector<1x1xf32>
    %185 = arith.mulf %183, %184 : vector<1x1xf32>
    %cst_28 = arith.constant 2.000000e+00 : f32
    %186 = vector.broadcast %cst_28 : f32 to vector<1x1xf32>
    %187 = arith.subf %186, %185 : vector<1x1xf32>
    %188 = arith.mulf %184, %187 : vector<1x1xf32>
    %189 = arith.mulf %182, %188 : vector<1x1xf32>
    %190 = math.exp %189 : vector<1x1xf32>
    %cst_29 = arith.constant 1.000000e+00 : f32
    %191 = vector.broadcast %cst_29 : f32 to vector<1x1xf32>
    %192 = arith.subf %190, %191 : vector<1x1xf32>
    %c0_30 = arith.constant 0 : index
    %c0_31 = arith.constant 0 : index
    %c0_32 = arith.constant 0 : index
    %193 = vector.load %arg5[%c0_30, %c0_31, %c0_32] : memref<1x1x1xf32, #tpu.memory_space<vmem>>, vector<1x1x1xf32>
    %194 = vector.shape_cast %193 : vector<1x1x1xf32> to vector<1x1xf32>
    %195 = vector.shape_cast %192 : vector<1x1xf32> to vector<1x1x1xf32>
    tpu.vector_store %arg5[%c0_30, %c0_31, %c0_32], %195 {strides = array<i32>} : memref<1x1x1xf32, #tpu.memory_space<vmem>>, vector<1x1x1xf32>,
    return
  }
  func.func @transform_0(%arg0: i32) -> (i32, i32, i32) {
    %c0_i32 = arith.constant 0 : i32
    %c0_i32_0 = arith.constant 0 : i32
    %c0_i32_1 = arith.constant 0 : i32
    return %arg0, %c0_i32, %c0_i32_0 : i32, i32, i32
  }
  func.func @transform_1(%arg0: i32) -> (i32, i32, i32) {
    %c0_i32 = arith.constant 0 : i32
    %c0_i32_0 = arith.constant 0 : i32
    %c0_i32_1 = arith.constant 0 : i32
    return %arg0, %c0_i32, %c0_i32_0 : i32, i32, i32
  }
  func.func @transform_2(%arg0: i32) -> (i32, i32, i32) {
    %c0_i32 = arith.constant 0 : i32
    %c0_i32_0 = arith.constant 0 : i32
    %c0_i32_1 = arith.constant 0 : i32
    return %arg0, %c0_i32, %c0_i32_0 : i32, i32, i32
  }
  func.func @transform_3(%arg0: i32) -> (i32, i32, i32) {
    %c0_i32 = arith.constant 0 : i32
    %c0_i32_0 = arith.constant 0 : i32
    %c0_i32_1 = arith.constant 0 : i32
    return %arg0, %c0_i32, %c0_i32_0 : i32, i32, i32
  }
  func.func @transform_4(%arg0: i32) -> (i32, i32, i32) {
    %c0_i32 = arith.constant 0 : i32
    %c0_i32_0 = arith.constant 0 : i32
    %c0_i32_1 = arith.constant 0 : i32
    return %arg0, %c0_i32, %c0_i32_0 : i32, i32, i32
  }
}

</mosaic_0001>

<llo_original>
// kernel: tpu_custom_call.1
$region0: #{tpu_custom_call.1}
  #allocation0 [shape = 'u32[]', space=smem, size = 0x4, offset = 0x4, fixed_abs, tag = 'smem constant byte address 0x4 - core index']
  #allocation1 [shape = 'u32[144,128]{1,0:T(1,128)}', space=vmem, size = 0x12000, scoped, tag = 'internal scratch']
  %s0 = inlined_call_operand.hbm [shape: f32[4,1,8], index: 0, kind: input, shape index: {}]
  %s1 = inlined_call_operand.hbm [shape: f32[4,1,8], index: 1, kind: input, shape index: {}]
  %s2 = inlined_call_operand.vmem [shape: f32[4,1,8], index: 2, kind: input, shape index: {}]
  %s3 = inlined_call_operand.vmem [shape: f32[4,1,8], index: 3, kind: input, shape index: {}]
  %s4 = inlined_call_operand.vmem [shape: f32[4,1,1], index: 4, kind: output, shape index: {}]
  %s5 = sld [smem:[#allocation0]]
  $region57: #{tpu_custom_call.1} parent=0
    _
  %s7 = ssub.s32 1, %s5
  %s8 = scalar_select 0, %s7, %s5
  $region1: #{tpu_custom_call.1} parent=0
    #allocation2 [shape = 'u8[1024]{0}', space=vmem, size = 0x400, scoped, tag = 'input window, operand 0']
    #allocation3 [shape = 's32[2]{0}', space=sflag, size = 0x8, scoped, tag = 'scoped memory for tpu_custom_call.1']
    #allocation4 [shape = 'u8[1024]{0}', space=vmem, size = 0x400, scoped, tag = 'input window, operand 1']
    #allocation5 [shape = 's32[2]{0}', space=sflag, size = 0x8, scoped, tag = 'scoped memory for tpu_custom_call.1']
    %9 = vsyncpa [#allocation3], 0
    %s10 = scalar_lea.sflag [#allocation3], 1
    %11 = vsyncpa %s10, 0
    %12 = vsyncpa [#allocation5], 0
    %s13 = scalar_lea.sflag [#allocation5], 1
    %14 = vsyncpa %s13, 0
    loop: start=0, step=1, limit=6
    $region2: #{tpu_custom_call.1} parent=1 // loop_pre_header
      _
    $region3: #{tpu_custom_call.1} parent=1 // loop_header
      %s16 = sphi 0, %s20
      %p17 = scmp.ge.s32.totalorder %s16, 6
      %s26 = sphi 0, %s28
      %s29 = sphi 0, %s26
      %s30 = sphi 0, %s29
      %s46 = sphi 0, %s30
      %s52 = sphi 0, %s54
      %s55 = sphi 0, %s52
      %s56 = sphi 0, %s55
      %s72 = sphi 0, %s56
      %s78 = sphi 0, %s80
      %s81 = sphi 0, %s78
      %s82 = sphi 0, %s81
      %s98 = sphi 0, %s82
      %s104 = sphi 0, %s106
      %s107 = sphi 0, %s104
      %s108 = sphi 0, %s107
      %s124 = sphi 0, %s108
      %s130 = sphi 0, %s132
      %s133 = sphi 0, %s130
      %s134 = sphi 0, %s133
      %s150 = sphi 0, %s134
    $region4: #{tpu_custom_call.1} parent=1 // loop_header_branch
      %19 = sbr.rel (%p17) target = $region8
    $region5: #{tpu_custom_call.1} parent=1 // loop_body
      %s21 = ssub.s32 %s16, 1
      %s22 = ssub.s32 %s16, 2
      %s23 = sadd.s32 %s16, 1
      %s24 = ssub.s32 %s16, %s23
      %p25 = scmp.eq.s32.totalorder %s24, 0
      %s27 = sadd.s32 %s26, 1
      %s28 = scalar_select %p25, %s26, %s27
      %p31 = pneg %p25
      %p32 = scmp.eq.s32.totalorder %s16, 3
      %p33 = por %p31, %p32
      %p34 = scmp.ne.s32.totalorder %s26, %s29
      %p35 = scmp.eq.s32.totalorder %s16, 0
      %p36 = por %p34, %p35
      %p37 = scmp.ne.s32.totalorder %s26, %s29
      %p38 = scmp.eq.s32.totalorder %s21, 3
      %p39 = por %p37, %p38
      %p40 = scmp.ne.s32.totalorder %s29, %s30
      %p41 = scmp.eq.s32.totalorder %s21, 0
      %p42 = por %p40, %p41
      %p43 = scmp.ne.s32.totalorder %s29, %s30
      %p44 = scmp.eq.s32.totalorder %s22, 3
      %p45 = por %p43, %p44
      %p47 = scmp.ne.s32.totalorder %s30, %s46
      %p48 = scmp.eq.s32.totalorder %s22, 0
      %p49 = por %p47, %p48
      %s50 = ssub.s32 %s16, %s23
      %p51 = scmp.eq.s32.totalorder %s50, 0
      %s53 = sadd.s32 %s52, 1
      %s54 = scalar_select %p51, %s52, %s53
      %p57 = pneg %p51
      %p58 = scmp.eq.s32.totalorder %s16, 3
      %p59 = por %p57, %p58
      %p60 = scmp.ne.s32.totalorder %s52, %s55
      %p61 = scmp.eq.s32.totalorder %s16, 0
      %p62 = por %p60, %p61
      %p63 = scmp.ne.s32.totalorder %s52, %s55
      %p64 = scmp.eq.s32.totalorder %s21, 3
      %p65 = por %p63, %p64
      %p66 = scmp.ne.s32.totalorder %s55, %s56
      %p67 = scmp.eq.s32.totalorder %s21, 0
      %p68 = por %p66, %p67
      %p69 = scmp.ne.s32.totalorder %s55, %s56
      %p70 = scmp.eq.s32.totalorder %s22, 3
      %p71 = por %p69, %p70
      %p73 = scmp.ne.s32.totalorder %s56, %s72
      %p74 = scmp.eq.s32.totalorder %s22, 0
      %p75 = por %p73, %p74
      %s76 = ssub.s32 %s16, %s23
      %p77 = scmp.eq.s32.totalorder %s76, 0
      %s79 = sadd.s32 %s78, 1
      %s80 = scalar_select %p77, %s78, %s79
      %p83 = pneg %p77
      %p84 = scmp.eq.s32.totalorder %s16, 3
      %p85 = por %p83, %p84
      %p86 = scmp.ne.s32.totalorder %s78, %s81
      %p87 = scmp.eq.s32.totalorder %s16, 0
      %p88 = por %p86, %p87
      %p89 = scmp.ne.s32.totalorder %s78, %s81
      %p90 = scmp.eq.s32.totalorder %s21, 3
      %p91 = por %p89, %p90
      %p92 = scmp.ne.s32.totalorder %s81, %s82
      %p93 = scmp.eq.s32.totalorder %s21, 0
      %p94 = por %p92, %p93
      %p95 = scmp.ne.s32.totalorder %s81, %s82
      %p96 = scmp.eq.s32.totalorder %s22, 3
      %p97 = por %p95, %p96
      %p99 = scmp.ne.s32.totalorder %s82, %s98
      %p100 = scmp.eq.s32.totalorder %s22, 0
      %p101 = por %p99, %p100
      %s102 = ssub.s32 %s16, %s23
      %p103 = scmp.eq.s32.totalorder %s102, 0
      %s105 = sadd.s32 %s104, 1
      %s106 = scalar_select %p103, %s104, %s105
      %p109 = pneg %p103
      %p110 = scmp.eq.s32.totalorder %s16, 3
      %p111 = por %p109, %p110
      %p112 = scmp.ne.s32.totalorder %s104, %s107
      %p113 = scmp.eq.s32.totalorder %s16, 0
      %p114 = por %p112, %p113
      %p115 = scmp.ne.s32.totalorder %s104, %s107
      %p116 = scmp.eq.s32.totalorder %s21, 3
      %p117 = por %p115, %p116
      %p118 = scmp.ne.s32.totalorder %s107, %s108
      %p119 = scmp.eq.s32.totalorder %s21, 0
      %p120 = por %p118, %p119
      %p121 = scmp.ne.s32.totalorder %s107, %s108
      %p122 = scmp.eq.s32.totalorder %s22, 3
      %p123 = por %p121, %p122
      %p125 = scmp.ne.s32.totalorder %s108, %s124
      %p126 = scmp.eq.s32.totalorder %s22, 0
      %p127 = por %p125, %p126
      %s128 = ssub.s32 %s16, %s23
      %p129 = scmp.eq.s32.totalorder %s128, 0
      %s131 = sadd.s32 %s130, 1
      %s132 = scalar_select %p129, %s130, %s131
      %p135 = pneg %p129
      %p136 = scmp.eq.s32.totalorder %s16, 3
      %p137 = por %p135, %p136
      %p138 = scmp.ne.s32.totalorder %s130, %s133
      %p139 = scmp.eq.s32.totalorder %s16, 0
      %p140 = por %p138, %p139
      %p141 = scmp.ne.s32.totalorder %s130, %s133
      %p142 = scmp.eq.s32.totalorder %s21, 3
      %p143 = por %p141, %p142
      %p144 = scmp.ne.s32.totalorder %s133, %s134
      %p145 = scmp.eq.s32.totalorder %s21, 0
      %p146 = por %p144, %p145
      %p147 = scmp.ne.s32.totalorder %s133, %s134
      %p148 = scmp.eq.s32.totalorder %s22, 3
      %p149 = por %p147, %p148
      %p151 = scmp.ne.s32.totalorder %s134, %s150
      %p152 = scmp.eq.s32.totalorder %s22, 0
      %p153 = por %p151, %p152
      %p154 = scmp.le.s32.totalorder 1, %s16
      %p155 = scmp.lt.s32.totalorder %s16, 5
      %p156 = pnand %p154, %p155
      %p157 = pneg %p156
      // Predicated region
      $region9: #{tpu_custom_call.1} parent=5 // pred_check
        _
      $region10: #{tpu_custom_call.1} parent=5 // pred_check_branch
        %159 = sbr.rel (%p156) target = $region12
      $region11: #{tpu_custom_call.1} parent=5 // pred_region
        %s160 = ssub.s32 %s16, 1
      $region12: #{tpu_custom_call.1} parent=5 // pred_fallthru
        _
      %p161 = scmp.lt.s32.totalorder %s16, 4
      // Predicated region
      $region13: #{tpu_custom_call.1} parent=5 // pred_check
        %p162 = pneg %p161
      $region14: #{tpu_custom_call.1} parent=5 // pred_check_branch
        %164 = sbr.rel (%p162) target = $region16
      $region15: #{tpu_custom_call.1} parent=5 // pred_region
        // Predicated region
        $region17: #{tpu_custom_call.1} parent=15 // pred_check
          %p165 = pneg %p36
        $region18: #{tpu_custom_call.1} parent=15 // pred_check_branch
          %167 = sbr.rel (%p165) target = $region20
        $region19: #{tpu_custom_call.1} parent=15 // pred_region
          %s168 = sand.u32 %s26, 1
          %s169 = scalar_lea.sflag [#allocation3], %s168
          %s170 = sand.u32 %s26, 1
          %s171 = scalar_lea.vmem [#allocation2], %s170
          %s173 = ssub.s32 16, 16
          %174 = vsyncadd %s169, %s173
          %s175 = smul.addr %s16, 16
          %s176 = scalar_lea.hbm %s0, %s175
          %s178 = sshll.u32 %s171, 4
          %s179 = int_to_ptr.vmem [resolvable:$true] %s178
          %181 = dma.hbm_to_vmem [thread:$0]  %s176, 16, %s179, %s169
        $region20: #{tpu_custom_call.1} parent=15 // pred_fallthru
          _
        // Predicated region
        $region21: #{tpu_custom_call.1} parent=15 // pred_check
          %p182 = pneg %p62
        $region22: #{tpu_custom_call.1} parent=15 // pred_check_branch
          %184 = sbr.rel (%p182) target = $region24
        $region23: #{tpu_custom_call.1} parent=15 // pred_region
          %s185 = sand.u32 %s52, 1
          %s186 = scalar_lea.sflag [#allocation5], %s185
          %s187 = sand.u32 %s52, 1
          %s188 = scalar_lea.vmem [#allocation4], %s187
          %s190 = ssub.s32 16, 16
          %191 = vsyncadd %s186, %s190
          %s192 = smul.addr %s16, 16
          %s193 = scalar_lea.hbm %s1, %s192
          %s195 = sshll.u32 %s188, 4
          %s196 = int_to_ptr.vmem [resolvable:$true] %s195
          %198 = dma.hbm_to_vmem [thread:$0]  %s193, 16, %s196, %s186
        $region24: #{tpu_custom_call.1} parent=15 // pred_fallthru
          _
        // Predicated region
        $region25: #{tpu_custom_call.1} parent=15 // pred_check
          %p199 = pneg %p88
        $region26: #{tpu_custom_call.1} parent=15 // pred_check_branch
          %201 = sbr.rel (%p199) target = $region28
        $region27: #{tpu_custom_call.1} parent=15 // pred_region
          %p202 = scmp.lt.s32.totalorder %s16, 3
          %s203 = scalar_select %p202, %s16, 3
          %s204 = scalar_lea.vmem %s2, %s203
        $region28: #{tpu_custom_call.1} parent=15 // pred_fallthru
          _
        // Predicated region
        $region29: #{tpu_custom_call.1} parent=15 // pred_check
          %p205 = pneg %p114
        $region30: #{tpu_custom_call.1} parent=15 // pred_check_branch
          %207 = sbr.rel (%p205) target = $region32
        $region31: #{tpu_custom_call.1} parent=15 // pred_region
          %p208 = scmp.lt.s32.totalorder %s16, 3
          %s209 = scalar_select %p208, %s16, 3
          %s210 = scalar_lea.vmem %s3, %s209
        $region32: #{tpu_custom_call.1} parent=15 // pred_fallthru
          _
      $region16: #{tpu_custom_call.1} parent=5 // pred_fallthru
        _
      %p211 = scmp.le.s32.totalorder 1, %s16
      %p212 = scmp.lt.s32.totalorder %s16, 5
      %p213 = pnand %p211, %p212
      %p214 = pneg %p213
      // Predicated region
      $region33: #{tpu_custom_call.1} parent=5 // pred_check
        _
      $region34: #{tpu_custom_call.1} parent=5 // pred_check_branch
        %216 = sbr.rel (%p213) target = $region36
      $region35: #{tpu_custom_call.1} parent=5 // pred_region
        %s217 = ssub.s32 %s16, 1
        %s218 = sand.u32 %s29, 1
        %s219 = scalar_lea.sflag [#allocation3], %s218
        %s220 = sand.u32 %s29, 1
        %s221 = scalar_lea.vmem [#allocation2], %s220
        // Predicated region
        $region37: #{tpu_custom_call.1} parent=35 // pred_check
          %p222 = pneg %p42
        $region38: #{tpu_custom_call.1} parent=35 // pred_check_branch
          %224 = sbr.rel (%p222) target = $region40
        $region39: #{tpu_custom_call.1} parent=35 // pred_region
          %225 = dma.done %s219, 16
        $region40: #{tpu_custom_call.1} parent=35 // pred_fallthru
          _
        %s226 = sand.u32 %s55, 1
        %s227 = scalar_lea.sflag [#allocation5], %s226
        %s228 = sand.u32 %s55, 1
        %s229 = scalar_lea.vmem [#allocation4], %s228
        // Predicated region
        $region41: #{tpu_custom_call.1} parent=35 // pred_check
          %p230 = pneg %p68
        $region42: #{tpu_custom_call.1} parent=35 // pred_check_branch
          %232 = sbr.rel (%p230) target = $region44
        $region43: #{tpu_custom_call.1} parent=35 // pred_region
          %233 = dma.done %s227, 16
        $region44: #{tpu_custom_call.1} parent=35 // pred_fallthru
          _
        %s234 = sand.u32 %s29, 1
        %s235 = scalar_lea.sflag [#allocation3], %s234
        %s236 = sand.u32 %s29, 1
        %s237 = scalar_lea.vmem [#allocation2], %s236
        %p238 = pneg %p42
        %p239 = pneg %p39
        %s240 = sand.u32 %s55, 1
        %s241 = scalar_lea.sflag [#allocation5], %s240
        %s242 = sand.u32 %s55, 1
        %s243 = scalar_lea.vmem [#allocation4], %s242
        %p244 = pneg %p68
        %p245 = pneg %p65
        %p246 = scmp.lt.s32.totalorder %s21, 3
        %s247 = scalar_select %p246, %s21, 3
        %s248 = scalar_lea.vmem %s2, %s247
        %p249 = pneg %p94
        %p250 = pneg %p91
        %p251 = scmp.lt.s32.totalorder %s21, 3
        %s252 = scalar_select %p251, %s21, 3
        %s253 = scalar_lea.vmem %s3, %s252
        %p254 = pneg %p120
        %p255 = pneg %p117
        %p256 = pneg %p146
        %p257 = pneg %p143
        %p258 = scmp.lt.s32.totalorder %s21, 3
        %s259 = scalar_select %p258, %s21, 3
        %s260 = scalar_lea.vmem %s4, %s259
        %p261 = scmp.lt.s32.totalorder %s21, 3
        %s262 = scalar_select %p261, %s21, 3
        %s263 = scalar_lea.vmem %s2, %s262
        %p264 = scmp.lt.s32.totalorder %s21, 3
        %s265 = scalar_select %p264, %s21, 3
        %s266 = scalar_lea.vmem %s3, %s265
        %p267 = scmp.lt.s32.totalorder %s21, 3
        %s268 = scalar_select %p267, %s21, 3
        %s269 = scalar_lea.vmem %s4, %s268
        %v270 = vld [vmem:[%s221] sm:$0x1]
        %v271 = vld [vmem:[%s229] sm:$0x1]
        %v273 = vlaneseq
        %v274 = vshrl.u32 %v273, 7
        %v275 = vsub.s32 0, %v274
        %v276 = vrot.slane %v271, %v275
        %vm278 = vcmask 1040384
        %v279 = vsel %vm278, %v270, %v276
        %v280 = vlog2.pop %v279
        %v281 = vmul.f32 %v280, 0.6931472
        %v282 = vld [vmem:[%s263] sm:$0x1]
        %v283 = vld [vmem:[%s266] sm:$0x1]
        %v285 = vlaneseq
        %v286 = vshrl.u32 %v285, 7
        %v287 = vsub.s32 0, %v286
        %v288 = vrot.slane %v283, %v287
        %v290 = vsel %vm278, %v282, %v288
        %vm291 = vcmask 58368
        %v292 = vsel %vm291, %v290, inf
        %293 = vmin.xlane.f32.xlu0 %v292
        %v294 = vpop.xlane.xlu0 %293
        %v295 = vsel %vm291, %v290, -inf
        %296 = vmax.xlane.f32.xlu0 %v295
        %v297 = vpop.xlane.xlu0 %296
        %v299 = vrot.slane %v294, 1
        %v301 = vmax.f32 %v294, %v299
        %v303 = vrot.slane %v297, 1
        %v305 = vmin.f32 %v297, %v303
        %v306 = vsel %vm291, %v290, 0.0
        %307 = vadd.xlane.f32.xlu0 %v306
        %v308 = vpop.xlane.xlu0 %307
        %v309 = vmul.f32 %v308, 0.125
        %v310 = vsub.f32 %v290, %v309
        %v311 = vmul.f32 %v310, %v310
        %v312 = vsel %vm291, %v311, 0.0
        %313 = vadd.xlane.f32.xlu0 %v312
        %v314 = vpop.xlane.xlu0 %313
        %v315 = vmul.f32 %v314, 0.125
        %v316 = vrsqrt.pop %v315
        %v317 = vmul.f32 %v315, %v316
        %v318 = vmul.f32 %v310, %v316
        %v319 = vmul.f32 %v318, %v318
        %v320 = vmul.f32 %v319, %v318
        %v321 = vmul.f32 %v319, %v319
        %v322 = vmul.f32 %v320, %v319
        %v323 = vmul.f32 %v320, %v320
        %v324 = vmul.f32 %v320, %v281
        %v325 = vmul.f32 %v319, %v281
        %v326 = vmul.f32 %v318, %v281
        %v328 = vrot.slane %v319, 6
        %v331 = vrot.slane %v320, 4
        %v334 = vrot.slane %v321, 2
        %v337 = vrot.slane %v323, 6
        %v340 = vrot.slane %v324, 4
        %v343 = vrot.slane %v325, 2
        %v346 = vrot.slane %v281, 6
        %vm348 = vcmask 1041408
        %v349 = vsel %vm348, %v318, %v328
        %vm350 = vcmask 1043456
        %v351 = vsel %vm350, %v349, %v331
        %vm352 = vcmask 1045504
        %v353 = vsel %vm352, %v351, %v334
        %v354 = vsel %vm348, %v322, %v337
        %v355 = vsel %vm350, %v354, %v340
        %v356 = vsel %vm352, %v355, %v343
        %v357 = vsel %vm348, %v326, %v346
        %vm358 = vcmask 64512
        %v359 = vsel %vm358, %v353, 0.0
        %360 = vadd.xlane.f32.xlu0 %v359
        %v361 = vpop.xlane.xlu0 %360
        %v362 = vsel %vm358, %v356, 0.0
        %363 = vadd.xlane.f32.xlu0 %v362
        %v364 = vpop.xlane.xlu0 %363
        %vm365 = vcmask 60416
        %v366 = vsel %vm365, %v357, 0.0
        %367 = vadd.xlane.f32.xlu0 %v366
        %v368 = vpop.xlane.xlu0 %367
        %v369 = vrcp.pop %v364
        %v370 = vmul.f32 %v364, %v369
        %v371 = vsub.f32 2.0, %v370
        %v372 = vmul.f32 %v369, %v371
        %v374 = vrot.slane %v372, 2
        %v376 = vmul.f32 %v364, %v374
        %v377 = vmul.f32 %v376, %v364
        %v379 = vrot.slane %v377, 2
        %v381 = vsub.f32 %v361, %v379
        %v383 = vrot.slane %v361, 6
        %v385 = vmul.f32 %v376, %v383
        %v387 = vrot.slane %v385, 4
        %v389 = vsub.f32 %v361, %v387
        %v390 = vrot.slane %v361, 4
        %v392 = vmul.f32 %v376, %v390
        %v394 = vrot.slane %v392, 6
        %v396 = vsub.f32 %v361, %v394
        %v398 = vrot.slane %v364, 4
        %v400 = vmul.f32 %v376, %v398
        %v402 = vrot.slane %v400, 2
        %v404 = vsub.f32 %v364, %v402
        %v405 = vrot.slane %v372, 4
        %v407 = vmul.f32 %v361, %v405
        %v408 = vrot.slane %v364, 2
        %v410 = vmul.f32 %v407, %v408
        %v412 = vrot.slane %v410, 2
        %v414 = vsub.f32 %v361, %v412
        %v415 = vmul.f32 %v407, %v361
        %v417 = vrot.slane %v415, 4
        %v419 = vsub.f32 %v361, %v417
        %v420 = vmul.f32 %v407, %v383
        %v422 = vrot.slane %v420, 6
        %v424 = vsub.f32 %v361, %v422
        %v425 = vrot.slane %v364, 6
        %v427 = vmul.f32 %v407, %v425
        %v429 = vrot.slane %v427, 6
        %v431 = vsub.f32 %v368, %v429
        %v432 = vrot.slane %v372, 6
        %v434 = vmul.f32 %v361, %v432
        %v435 = vmul.f32 %v434, %v398
        %v437 = vrot.slane %v435, 2
        %v439 = vsub.f32 %v361, %v437
        %v440 = vrot.slane %v361, 2
        %v442 = vmul.f32 %v434, %v440
        %v444 = vrot.slane %v442, 4
        %v446 = vsub.f32 %v361, %v444
        %v447 = vmul.f32 %v434, %v361
        %v448 = vsub.f32 8.0, %v447
        %v449 = vmul.f32 %v434, %v364
        %v451 = vrot.slane %v449, 2
        %v453 = vsub.f32 %v368, %v451
        %v454 = vrcp.pop %v381
        %v455 = vmul.f32 %v381, %v454
        %v456 = vsub.f32 2.0, %v455
        %v457 = vmul.f32 %v454, %v456
        %v459 = vrot.slane %v457, 2
        %v461 = vmul.f32 %v414, %v459
        %v462 = vmul.f32 %v461, %v389
        %v464 = vrot.slane %v462, 2
        %v466 = vsub.f32 %v419, %v464
        %v468 = vrot.slane %v396, 6
        %v470 = vmul.f32 %v461, %v468
        %v472 = vrot.slane %v470, 4
        %v474 = vsub.f32 %v424, %v472
        %v476 = vrot.slane %v404, 2
        %v478 = vmul.f32 %v461, %v476
        %v480 = vrot.slane %v478, 4
        %v482 = vsub.f32 %v431, %v480
        %v483 = vrot.slane %v457, 4
        %v485 = vmul.f32 %v439, %v483
        %v487 = vrot.slane %v389, 2
        %v489 = vmul.f32 %v485, %v487
        %v491 = vrot.slane %v489, 2
        %v493 = vsub.f32 %v446, %v491
        %v494 = vmul.f32 %v485, %v396
        %v496 = vrot.slane %v494, 6
        %v498 = vsub.f32 %v448, %v496
        %v499 = vrot.slane %v404, 4
        %v501 = vmul.f32 %v485, %v499
        %v502 = vsub.f32 %v453, %v501
        %v503 = vrcp.pop %v466
        %v504 = vmul.f32 %v466, %v503
        %v505 = vsub.f32 2.0, %v504
        %v506 = vmul.f32 %v503, %v505
        %v508 = vrot.slane %v506, 2
        %v510 = vmul.f32 %v493, %v508
        %v511 = vmul.f32 %v510, %v474
        %v513 = vrot.slane %v511, 4
        %v515 = vsub.f32 %v498, %v513
        %v516 = vmul.f32 %v510, %v482
        %v518 = vrot.slane %v516, 6
        %v520 = vsub.f32 %v502, %v518
        %v521 = vrcp.pop %v515
        %v522 = vmul.f32 %v515, %v521
        %v523 = vsub.f32 2.0, %v522
        %v524 = vmul.f32 %v521, %v523
        %v526 = vrot.slane %v524, 2
        %v528 = vmul.f32 %v520, %v526
        %v530 = vrot.slane %v528, 2
        %v532 = vmul.f32 %v474, %v530
        %v533 = vsub.f32 %v482, %v532
        %v534 = vmul.f32 %v533, %v508
        %v536 = vrot.slane %v534, 4
        %v538 = vmul.f32 %v389, %v536
        %v540 = vrot.slane %v538, 6
        %v542 = vsub.f32 %v404, %v540
        %v543 = vmul.f32 %v396, %v528
        %v545 = vrot.slane %v543, 4
        %v547 = vsub.f32 %v542, %v545
        %v548 = vmul.f32 %v547, %v457
        %v550 = vrot.slane %v548, 6
        %v552 = vmul.f32 %v364, %v550
        %v554 = vrot.slane %v552, 4
        %v556 = vsub.f32 %v364, %v554
        %v557 = vrot.slane %v534, 2
        %v559 = vmul.f32 %v361, %v557
        %v561 = vrot.slane %v559, 2
        %v563 = vsub.f32 %v556, %v561
        %v564 = vrot.slane %v528, 6
        %v566 = vmul.f32 %v361, %v564
        %v567 = vsub.f32 %v563, %v566
        %v568 = vmul.f32 %v567, %v432
        %v569 = vlaneseq
        %v570 = vshrl.u32 %v569, 7
        %v571 = vsub.s32 0, %v570
        %v572 = vrot.slane %v305, %v571
        %v573 = vsub.f32 %v572, %v309
        %v574 = vmul.f32 %v573, %v316
        %v575 = vlaneseq
        %v576 = vshrl.u32 %v575, 7
        %v577 = vsub.s32 0, %v576
        %v578 = vrot.slane %v301, %v577
        %v579 = vsub.f32 %v578, %v309
        %v580 = vmul.f32 %v579, %v316
        %v581 = vmul.f32 %v574, %v574
        %v582 = vmul.f32 %v581, %v574
        %v583 = vmul.f32 %v582, %v574
        %v585 = vrot.slane %v583, 4
        %v587 = vmul.f32 %v568, %v585
        %v588 = vmul.f32 %v587, 0.25
        %v590 = vrot.slane %v582, 2
        %v592 = vmul.f32 %v548, %v590
        %v593 = vmul.f32 %v592, 0.33333334
        %v595 = vrot.slane %v593, 2
        %v597 = vadd.f32 %v588, %v595
        %v598 = vmul.f32 %v534, %v581
        %v599 = vmul.f32 %v598, 0.5
        %v601 = vrot.slane %v599, 4
        %v603 = vadd.f32 %v597, %v601
        %v605 = vrot.slane %v574, 6
        %v607 = vmul.f32 %v528, %v605
        %v609 = vrot.slane %v607, 6
        %v611 = vadd.f32 %v603, %v609
        %v612 = vmul.f32 %v580, %v580
        %v613 = vmul.f32 %v612, %v580
        %v614 = vmul.f32 %v613, %v580
        %v616 = vrot.slane %v614, 4
        %v618 = vmul.f32 %v568, %v616
        %v619 = vmul.f32 %v618, 0.25
        %v621 = vrot.slane %v613, 2
        %v623 = vmul.f32 %v548, %v621
        %v624 = vmul.f32 %v623, 0.33333334
        %v626 = vrot.slane %v624, 2
        %v628 = vadd.f32 %v619, %v626
        %v629 = vmul.f32 %v534, %v612
        %v630 = vmul.f32 %v629, 0.5
        %v632 = vrot.slane %v630, 4
        %v634 = vadd.f32 %v628, %v632
        %v636 = vrot.slane %v580, 6
        %v638 = vmul.f32 %v528, %v636
        %v640 = vrot.slane %v638, 6
        %v642 = vadd.f32 %v634, %v640
        %v643 = vsub.f32 %v611, %v642
        %v645 = vrot.slane %v317, 4
        %v647 = vmul.f32 %v643, %v645
        %v649 = vrot.slane %v647, 7
        %v651 = vsub.f32 %v647, %v649
        %v652 = vsub.f32 %v305, %v301
        %v653 = vrcp.pop %v652
        %v654 = vmul.f32 %v652, %v653
        %v655 = vsub.f32 2.0, %v654
        %v656 = vmul.f32 %v653, %v655
        %v658 = vrot.slane %v656, 3
        %v660 = vmul.f32 %v651, %v658
        %v661 = vmul.f32 %v660, 1.442695
        %v662 = vpow.pop %v661
        %v663 = vsub.f32 %v662, 1.0
        %vm664 = vcmask 5125
        %665 = vst.msk [vmem:[%s269 - $0x5] sm:$0x20] %vm664, %v663
        %p666 = scmp.lt.s32.totalorder %s21, 3
        %s667 = scalar_select %p666, %s21, 3
        %s668 = scalar_lea.vmem %s4, %s667
        // Predicated region
        $region45: #{tpu_custom_call.1} parent=35 // pred_check
          %p669 = pneg %p143
        $region46: #{tpu_custom_call.1} parent=35 // pred_check_branch
          %671 = sbr.rel (%p669) target = $region48
        $region47: #{tpu_custom_call.1} parent=35 // pred_region
          _
        $region48: #{tpu_custom_call.1} parent=35 // pred_fallthru
          _
      $region36: #{tpu_custom_call.1} parent=5 // pred_fallthru
        _
      %p672 = scmp.le.s32.totalorder 2, %s16
      // Predicated region
      $region49: #{tpu_custom_call.1} parent=5 // pred_check
        %p673 = pneg %p672
      $region50: #{tpu_custom_call.1} parent=5 // pred_check_branch
        %675 = sbr.rel (%p673) target = $region52
      $region51: #{tpu_custom_call.1} parent=5 // pred_region
        %s676 = ssub.s32 %s16, 2
        // Predicated region
        $region53: #{tpu_custom_call.1} parent=51 // pred_check
          %p677 = pneg %p149
        $region54: #{tpu_custom_call.1} parent=51 // pred_check_branch
          %679 = sbr.rel (%p677) target = $region56
        $region55: #{tpu_custom_call.1} parent=51 // pred_region
          %p680 = scmp.lt.s32.totalorder %s22, 3
          %s681 = scalar_select %p680, %s22, 3
          %s682 = scalar_lea.vmem %s4, %s681
        $region56: #{tpu_custom_call.1} parent=51 // pred_fallthru
          _
      $region52: #{tpu_custom_call.1} parent=5 // pred_fallthru
        _
    $region6: #{tpu_custom_call.1} parent=1 // loop_footer
      %s20 = sadd.s32 1, %s16
    $region7: #{tpu_custom_call.1} parent=1 // loop_footer_branch
      %15 = sbr.rel target = $region3
    $region8: #{tpu_custom_call.1} parent=1 // loop_exit
      _
    %683 = vsyncpa [#allocation3], 1
    %s684 = scalar_lea.sflag [#allocation3], 1
    %685 = vsyncpa %s684, 1
    %686 = vsyncpa [#allocation5], 1
    %s687 = scalar_lea.sflag [#allocation5], 1
    %688 = vsyncpa %s687, 1

</llo_original>
